<compile_context>
chip_gen: v7x
topology: tpu7x:2x2x1
jax: 0.10.0
libtpu: 0.0.40
codegen_flags: <defaults>
</compile_context>

<pallas_src>
import jax
import jax.numpy as jnp
from jax.experimental import pallas as pl
from jax.experimental.pallas import tpu as pltpu

# ---- hyperparameters (small, consistent with the module's globals) ----
N_EMBED = 32            # n_embd
HIDDEN = 4 * N_EMBED    # 128  (multiple of 128 -> lane-dense intermediate)
BLOCK_SIZE = 8          # T
BATCH = 2
DROPOUT = 0.0           # eval mode -> identity

TILE_M = 512            # row tile at scale; whole problem when n < TILE_M


def _ffn_kernel(x_ref, w1_ref, b1_ref, w2_ref, b2_ref, o_ref):
    """One row-tile of the FFN: relu(x @ W1 + b1) @ W2 + b2.

    Dot operands are bf16 (MXU-native, halves streamed operand bytes); both
    accumulations and all elementwise work (bias add, ReLU) are f32.
    """
    x = x_ref[...].astype(jnp.bfloat16)                                   # (tm, C)
    h = jnp.dot(x, w1_ref[...], preferred_element_type=jnp.float32)      # (tm, 4C) f32
    h = jnp.maximum(h + b1_ref[...], 0.0)                                 # bias + ReLU, f32 VPU
    out = jnp.dot(h.astype(jnp.bfloat16), w2_ref[...],
                  preferred_element_type=jnp.float32)                     # (tm, C) f32
    out = out + b2_ref[...]
    o_ref[...] = out.astype(o_ref.dtype)
    # NOTE: dropout is identity in eval mode (DROPOUT == 0.0); nothing to do here.
    # TODO(synk): training-mode dropout (pltpu.prng_seed + prng_random_bits mask).
    # TODO(synk): C=32 output fills only 32/128 lanes (masked vst); a lane-dense
    # repack (4 tokens per 128-lane row) requires an in-kernel (tm,32)->(tm/4,128)
    # relayout across the (8,128) tile boundary — left out to keep the kernel's
    # output layout identical to the module's (B, T, C) contract.


def feed_forward(x, w1, b1, w2, b2, *, tile_m=TILE_M):
    """x: (B, T, C) f32; W1: (C, 4C); b1: (1, 4C); W2: (4C, C); b2: (1, C)."""
    b, t, c = x.shape
    hidden = w1.shape[1]
    n = b * t
    x2d = x.reshape(n, c)

    # Row tiling: big slabs when there are many tokens (amortizes per-step
    # overhead, fills the MXU M dim, weights stay resident); single step when tiny.
    tm = tile_m if n >= tile_m else n
    n_pad = pl.cdiv(n, tm) * tm
    if n_pad != n:
        x2d = jnp.pad(x2d, ((0, n_pad - n), (0, 0)))

    # Weights enter as bf16 (pure MXU operands); biases stay f32 (VPU work is f32).
    w1b = w1.astype(jnp.bfloat16)
    w2b = w2.astype(jnp.bfloat16)

    out2d = pl.pallas_call(
        _ffn_kernel,
        out_shape=jax.ShapeDtypeStruct((n_pad, c), x.dtype),
        grid=(n_pad // tm,),
        in_specs=[
            pl.BlockSpec((tm, c), lambda i: (i, 0)),          # x rows stream
            pl.BlockSpec((c, hidden), lambda i: (0, 0)),      # W1 resident
            pl.BlockSpec((1, hidden), lambda i: (0, 0)),      # b1 resident
            pl.BlockSpec((hidden, c), lambda i: (0, 0)),      # W2 resident
            pl.BlockSpec((1, c), lambda i: (0, 0)),           # b2 resident
        ],
        out_specs=pl.BlockSpec((tm, c), lambda i: (i, 0)),
        compiler_params=pltpu.CompilerParams(
            # Row tiles are independent -> shard across TensorCores on v7x megacore.
            dimension_semantics=("parallel",)),
    )(x2d, w1b, b1, w2b, b2)

    return out2d[:n].reshape(b, t, c)


def reference_ffn(x, w1, b1, w2, b2):
    """Plain-JAX f32 reference mirroring the PyTorch forward (eval mode)."""
    h = jnp.maximum(x @ w1 + b1[0], 0.0)
    return h @ w2 + b2[0]


if __name__ == "__main__":
    key = jax.random.PRNGKey(0)
    kx, k1, kb1, k2, kb2 = jax.random.split(key, 5)

    x = jax.random.normal(kx, (BATCH, BLOCK_SIZE, N_EMBED), dtype=jnp.float32)
    w1 = jax.random.normal(k1, (N_EMBED, HIDDEN), dtype=jnp.float32) * 0.1
    b1 = jax.random.normal(kb1, (1, HIDDEN), dtype=jnp.float32) * 0.1
    w2 = jax.random.normal(k2, (HIDDEN, N_EMBED), dtype=jnp.float32) * 0.1
    b2 = jax.random.normal(kb2, (1, N_EMBED), dtype=jnp.float32) * 0.1

    out = feed_forward(x, w1, b1, w2, b2)
    out = jax.block_until_ready(out)

    ref = reference_ffn(x, w1, b1, w2, b2)
    assert out.shape == (BATCH, BLOCK_SIZE, N_EMBED)
    # bf16 MXU operands vs f32 ground truth -> relaxed tolerance.
    assert jnp.allclose(out, ref, atol=3e-2, rtol=3e-2), "mismatch vs reference"

    print("KERNEL_OK")
</pallas_src>

<mosaic_0001>
module attributes {stable_mosaic.version = 11 : i64} {
  func.func @_ffn_kernel(%arg0: i32, %arg1: memref<16x32xf32, #tpu.memory_space<vmem>>, %arg2: memref<32x128xbf16, #tpu.memory_space<vmem>>, %arg3: memref<1x128xf32, #tpu.memory_space<vmem>>, %arg4: memref<128x32xbf16, #tpu.memory_space<vmem>>, %arg5: memref<1x32xf32, #tpu.memory_space<vmem>>, %arg6: memref<16x32xf32, #tpu.memory_space<vmem>>) attributes {dimension_semantics = [#tpu.dimension_semantics<parallel>], iteration_bounds = array<i64: 1>, scalar_prefetch = 0 : i64, scratch_operands = 0 : i64, tpu.core_type = #tpu.core_type<tc>, window_params = [{transform_indices = @transform_0, window_bounds = array<i64: 16, 32>}, {pipeline_mode = #tpu.pipeline_mode<synchronous>, transform_indices = @transform_1, window_bounds = array<i64: 32, 128>}, {pipeline_mode = #tpu.pipeline_mode<synchronous>, transform_indices = @transform_2, window_bounds = array<i64: 1, 128>}, {pipeline_mode = #tpu.pipeline_mode<synchronous>, transform_indices = @transform_3, window_bounds = array<i64: 128, 32>}, {pipeline_mode = #tpu.pipeline_mode<synchronous>, transform_indices = @transform_4, window_bounds = array<i64: 1, 32>}, {transform_indices = @transform_5, window_bounds = array<i64: 16, 32>}]} {
    %c0 = arith.constant 0 : index
    %c0_0 = arith.constant 0 : index
    %0 = vector.load %arg1[%c0, %c0_0] : memref<16x32xf32, #tpu.memory_space<vmem>>, vector<16x32xf32>
    %1 = arith.truncf %0 : vector<16x32xf32> to vector<16x32xbf16>
    %c0_1 = arith.constant 0 : index
    %c0_2 = arith.constant 0 : index
    %2 = vector.load %arg2[%c0_1, %c0_2] : memref<32x128xbf16, #tpu.memory_space<vmem>>, vector<32x128xbf16>
    %cst = arith.constant dense<0.000000e+00> : vector<16x128xf32>
    %3 = tpu.matmul %1, %2, %cst {dimension_numbers = #tpu.dot_dimension_numbers<[1], [0], [0], [1], [0, 0, 1, 1], [], []>} : vector<16x32xbf16>, vector<32x128xbf16>, vector<16x128xf32> -> vector<16x128xf32>
    %c0_3 = arith.constant 0 : index
    %c0_4 = arith.constant 0 : index
    %4 = vector.load %arg3[%c0_3, %c0_4] : memref<1x128xf32, #tpu.memory_space<vmem>>, vector<1x128xf32>
    %5 = vector.broadcast %4 : vector<1x128xf32> to vector<16x128xf32>
    %6 = arith.addf %3, %5 : vector<16x128xf32>
    %cst_5 = arith.constant 0.000000e+00 : f32
    %7 = vector.broadcast %cst_5 : f32 to vector<16x128xf32>
    %8 = arith.maximumf %6, %7 : vector<16x128xf32>
    %9 = arith.truncf %8 : vector<16x128xf32> to vector<16x128xbf16>
    %c0_6 = arith.constant 0 : index
    %c0_7 = arith.constant 0 : index
    %10 = vector.load %arg4[%c0_6, %c0_7] : memref<128x32xbf16, #tpu.memory_space<vmem>>, vector<128x32xbf16>
    %cst_8 = arith.constant dense<0.000000e+00> : vector<16x32xf32>
    %11 = tpu.matmul %9, %10, %cst_8 {dimension_numbers = #tpu.dot_dimension_numbers<[1], [0], [0], [1], [0, 0, 1, 1], [], []>} : vector<16x128xbf16>, vector<128x32xbf16>, vector<16x32xf32> -> vector<16x32xf32>
    %c0_9 = arith.constant 0 : index
    %c0_10 = arith.constant 0 : index
    %12 = vector.load %arg5[%c0_9, %c0_10] : memref<1x32xf32, #tpu.memory_space<vmem>>, vector<1x32xf32>
    %13 = vector.broadcast %12 : vector<1x32xf32> to vector<16x32xf32>
    %14 = arith.addf %11, %13 : vector<16x32xf32>
    %c0_11 = arith.constant 0 : index
    %c0_12 = arith.constant 0 : index
    %15 = vector.load %arg6[%c0_11, %c0_12] : memref<16x32xf32, #tpu.memory_space<vmem>>, vector<16x32xf32>
    tpu.vector_store %arg6[%c0_11, %c0_12], %14 {strides = array<i32>} : memref<16x32xf32, #tpu.memory_space<vmem>>, vector<16x32xf32>,
    return
  }
  func.func @transform_0(%arg0: i32) -> (i32, i32) {
    %c0_i32 = arith.constant 0 : i32
    %c0_i32_0 = arith.constant 0 : i32
    return %arg0, %c0_i32 : i32, i32
  }
  func.func @transform_1(%arg0: i32) -> (i32, i32) {
    %c0_i32 = arith.constant 0 : i32
    %c0_i32_0 = arith.constant 0 : i32
    %c0_i32_1 = arith.constant 0 : i32
    return %c0_i32, %c0_i32_0 : i32, i32
  }
  func.func @transform_2(%arg0: i32) -> (i32, i32) {
    %c0_i32 = arith.constant 0 : i32
    %c0_i32_0 = arith.constant 0 : i32
    %c0_i32_1 = arith.constant 0 : i32
    return %c0_i32, %c0_i32_0 : i32, i32
  }
  func.func @transform_3(%arg0: i32) -> (i32, i32) {
    %c0_i32 = arith.constant 0 : i32
    %c0_i32_0 = arith.constant 0 : i32
    %c0_i32_1 = arith.constant 0 : i32
    return %c0_i32, %c0_i32_0 : i32, i32
  }
  func.func @transform_4(%arg0: i32) -> (i32, i32) {
    %c0_i32 = arith.constant 0 : i32
    %c0_i32_0 = arith.constant 0 : i32
    %c0_i32_1 = arith.constant 0 : i32
    return %c0_i32, %c0_i32_0 : i32, i32
  }
  func.func @transform_5(%arg0: i32) -> (i32, i32) {
    %c0_i32 = arith.constant 0 : i32
    %c0_i32_0 = arith.constant 0 : i32
    return %arg0, %c0_i32 : i32, i32
  }
}

</mosaic_0001>

<llo_original>
// kernel: tpu_custom_call.1
$region0: #{tpu_custom_call.1}
  #allocation0 [shape = 'u32[]', space=smem, size = 0x4, offset = 0x4, fixed_abs, tag = 'smem constant byte address 0x4 - core index']
  #allocation1 [shape = 'u32[144,128]{1,0:T(1,128)}', space=vmem, size = 0x12000, scoped, tag = 'internal scratch']
  %s0 = inlined_call_operand.vmem [shape: f32[16,32], index: 0, kind: input, shape index: {}]
  %s1 = inlined_call_operand.vmem [shape: bf16[32,128], index: 1, kind: input, shape index: {}]
  %s2 = inlined_call_operand.vmem [shape: f32[1,128], index: 2, kind: input, shape index: {}]
  %s3 = inlined_call_operand.vmem [shape: bf16[128,32], index: 3, kind: input, shape index: {}]
  %s4 = inlined_call_operand.vmem [shape: f32[1,32], index: 4, kind: input, shape index: {}]
  %s5 = inlined_call_operand.hbm [shape: f32[16,32], index: 5, kind: output, shape index: {}]
  %s6 = sld [smem:[#allocation0]]
  $region30: #{tpu_custom_call.1} parent=0
    _
  %s8 = ssub.s32 1, %s6
  %s9 = scalar_select 0, %s8, %s6
  $region1: #{tpu_custom_call.1} parent=0
    #allocation2 [shape = 'u8[8192]{0}', space=vmem, size = 0x2000, scoped, tag = 'output window, operand 0, single buffered']
    #allocation3 [shape = 's32[1]{0}', space=sflag, size = 0x4, scoped, tag = 'scoped memory for tpu_custom_call.1']
    %10 = vsyncpa [#allocation3], 0
    // Predicated region
    $region2: #{tpu_custom_call.1} parent=1 // pred_check
      _
    $region3: #{tpu_custom_call.1} parent=1 // pred_check_branch
      %12 = sbr.rel (0) target = $region5
    $region4: #{tpu_custom_call.1} parent=1 // pred_region
      _
    $region5: #{tpu_custom_call.1} parent=1 // pred_fallthru
      _
    // Predicated region
    $region6: #{tpu_custom_call.1} parent=1 // pred_check
      _
    $region7: #{tpu_custom_call.1} parent=1 // pred_check_branch
      %14 = sbr.rel (0) target = $region9
    $region8: #{tpu_custom_call.1} parent=1 // pred_region
      _
    $region9: #{tpu_custom_call.1} parent=1 // pred_fallthru
      _
    // Predicated region
    $region10: #{tpu_custom_call.1} parent=1 // pred_check
      _
    $region11: #{tpu_custom_call.1} parent=1 // pred_check_branch
      %16 = sbr.rel (0) target = $region13
    $region12: #{tpu_custom_call.1} parent=1 // pred_region
      _
    $region13: #{tpu_custom_call.1} parent=1 // pred_fallthru
      _
    // Predicated region
    $region14: #{tpu_custom_call.1} parent=1 // pred_check
      _
    $region15: #{tpu_custom_call.1} parent=1 // pred_check_branch
      %18 = sbr.rel (0) target = $region17
    $region16: #{tpu_custom_call.1} parent=1 // pred_region
      _
    $region17: #{tpu_custom_call.1} parent=1 // pred_fallthru
      _
    // Predicated region
    $region18: #{tpu_custom_call.1} parent=1 // pred_check
      _
    $region19: #{tpu_custom_call.1} parent=1 // pred_check_branch
      %20 = sbr.rel (0) target = $region21
    $region20: #{tpu_custom_call.1} parent=1 // pred_region
      _
    $region21: #{tpu_custom_call.1} parent=1 // pred_fallthru
      _
    %v22 = vld [vmem:[%s0] sm:$0xff]
    %v23 = vld [vmem:[%s0 + $0x8] sm:$0xff]
    %v24 = vpack.c.bf16 %v23, %v22
    %v25 = vld [vmem:[%s1] sm:$0xf]
    %v26 = vld [vmem:[%s1 + $0x4] sm:$0xf]
    %v27 = vld [vmem:[%s1 + $0x8] sm:$0xf]
    %v28 = vld [vmem:[%s1 + $0xc] sm:$0xf]
    %v29 = vld [vmem:[%s2] sm:$0x1]
    %v31 = vlaneseq
    %v32 = vshrl.u32 %v31, 7
    %v33 = vsub.s32 0, %v32
    %v34 = vrot.slane %v29, %v33
    %v40 = vunpack.c.l.b16 %v25
    %v41 = vunpack.c.l.b16 %v26
    %v42 = vunpack.c.l.b16 %v27
    %v43 = vunpack.c.l.b16 %v28
    %v44 = vpack.c.b16 %v41, %v40
    %v45 = vpack.c.b16 %v43, %v42
    %vm48 = vcmask 261120
    %v50 = vsel %vm48, %v24, 0
    %52 = vmatprep.subr.bf16.mxu0 0
    %53 = vmatpush1.bf16.msra.mxu0 %v44
    %54 = vmatprep.subr.bf16.mxu0 0
    %55 = vmatpush1.bf16.msra.mxu0 %v45
    %56 = vmatprep.subr.bf16.mxu0 0
    %57 = vmatpush1.bf16.msra.mxu0 0
    %58 = vmatprep.subr.bf16.mxu0 0
    %59 = vmatpush1.bf16.msra.mxu0 0
    %60 = vmatprep.subr.bf16.mxu0 0
    %61 = vmatpush1.bf16.msra.mxu0 0
    %62 = vmatprep.subr.bf16.mxu0 0
    %63 = vmatpush1.bf16.msra.mxu0 0
    %64 = vmatprep.subr.bf16.mxu0 0
    %65 = vmatpush1.bf16.msra.mxu0 0
    %66 = vmatprep.subr.bf16.mxu0 0
    %67 = vmatpush1.bf16.msra.mxu0 0
    %68 = vmatprep.subr.bf16.mxu0 0
    %69 = vmatpush1.bf16.msra.mxu0 0
    %70 = vmatprep.subr.bf16.mxu0 0
    %71 = vmatpush1.bf16.msra.mxu0 0
    %72 = vmatprep.subr.bf16.mxu0 0
    %73 = vmatpush1.bf16.msra.mxu0 0
    %74 = vmatprep.subr.bf16.mxu0 0
    %75 = vmatpush1.bf16.msra.mxu0 0
    %76 = vmatprep.subr.bf16.mxu0 0
    %77 = vmatpush1.bf16.msra.mxu0 0
    %78 = vmatprep.subr.bf16.mxu0 0
    %79 = vmatpush1.bf16.msra.mxu0 0
    %80 = vmatprep.subr.bf16.mxu0 0
    %81 = vmatpush1.bf16.msra.mxu0 0
    %82 = vmatprep.subr.bf16.mxu0 0
    %83 = vmatpush1.bf16.msra.mxu0 0
    %84 = vmatprep.mubr.bf16.mxu0 0
    %85 = vmatmul.mubr.bf16.gmra.mrb[0].mxu0 %v50
    %v86 = vpop.f32.mrb[0].mxu0
    %v87 = vadd.f32 %v34, %v86
    %v88 = vpop.f32.mrb[0].mxu0
    %v89 = vpop.f32.mrb[0].mxu0
    %v90 = vadd.f32 %v34, %v89
    %v91 = vpop.f32.mrb[0].mxu0
    %92 = vdwg.mxu0
    %v93 = vmax.f32 %v87, 0.0
    %v94 = vmax.f32 %v90, 0.0
    %v95 = vpack.c.bf16 %v94, %v93
    %v96 = vld [vmem:[%s3] sm:$0xf]
    %v97 = vld [vmem:[%s3 + $0x4] sm:$0xf]
    %v98 = vld [vmem:[%s3 + $0x8] sm:$0xf]
    %v99 = vld [vmem:[%s3 + $0xc] sm:$0xf]
    %v100 = vld [vmem:[%s3 + $0x10] sm:$0xf]
    %v101 = vld [vmem:[%s3 + $0x14] sm:$0xf]
    %v102 = vld [vmem:[%s3 + $0x18] sm:$0xf]
    %v103 = vld [vmem:[%s3 + $0x1c] sm:$0xf]
    %v104 = vld [vmem:[%s3 + $0x20] sm:$0xf]
    %v105 = vld [vmem:[%s3 + $0x24] sm:$0xf]
    %v106 = vld [vmem:[%s3 + $0x28] sm:$0xf]
    %v107 = vld [vmem:[%s3 + $0x2c] sm:$0xf]
    %v108 = vld [vmem:[%s3 + $0x30] sm:$0xf]
    %v109 = vld [vmem:[%s3 + $0x34] sm:$0xf]
    %v110 = vld [vmem:[%s3 + $0x38] sm:$0xf]
    %v111 = vld [vmem:[%s3 + $0x3c] sm:$0xf]
    %v112 = vld [vmem:[%s4] sm:$0x1]
    %v114 = vlaneseq
    %v115 = vshrl.u32 %v114, 7
    %v116 = vsub.s32 0, %v115
    %v117 = vrot.slane %v112, %v116
    %v135 = vunpack.c.l.b16 %v96
    %v136 = vunpack.c.l.b16 %v97
    %v137 = vunpack.c.l.b16 %v98
    %v138 = vunpack.c.l.b16 %v99
    %v139 = vunpack.c.l.b16 %v100
    %v140 = vunpack.c.l.b16 %v101
    %v141 = vunpack.c.l.b16 %v102
    %v142 = vunpack.c.l.b16 %v103
    %v143 = vunpack.c.l.b16 %v104
    %v144 = vunpack.c.l.b16 %v105
    %v145 = vunpack.c.l.b16 %v106
    %v146 = vunpack.c.l.b16 %v107
    %v147 = vunpack.c.l.b16 %v108
    %v148 = vunpack.c.l.b16 %v109
    %v149 = vunpack.c.l.b16 %v110
    %v150 = vunpack.c.l.b16 %v111
    %v151 = vpack.c.b16 %v136, %v135
    %v152 = vpack.c.b16 %v138, %v137
    %v153 = vpack.c.b16 %v140, %v139
    %v154 = vpack.c.b16 %v142, %v141
    %v155 = vpack.c.b16 %v144, %v143
    %v156 = vpack.c.b16 %v146, %v145
    %v157 = vpack.c.b16 %v148, %v147
    %v158 = vpack.c.b16 %v150, %v149
    %167 = vmatprep.subr.bf16.mxu0 0
    %168 = vmatpush1.bf16.msra.mxu0 %v151
    %169 = vmatprep.subr.bf16.mxu0 0
    %170 = vmatpush1.bf16.msra.mxu0 %v152
    %171 = vmatprep.subr.bf16.mxu0 0
    %172 = vmatpush1.bf16.msra.mxu0 %v153
    %173 = vmatprep.subr.bf16.mxu0 0
    %174 = vmatpush1.bf16.msra.mxu0 %v154
    %175 = vmatprep.subr.bf16.mxu0 0
    %176 = vmatpush1.bf16.msra.mxu0 %v155
    %177 = vmatprep.subr.bf16.mxu0 0
    %178 = vmatpush1.bf16.msra.mxu0 %v156
    %179 = vmatprep.subr.bf16.mxu0 0
    %180 = vmatpush1.bf16.msra.mxu0 %v157
    %181 = vmatprep.subr.bf16.mxu0 0
    %182 = vmatpush1.bf16.msra.mxu0 %v158
    %183 = vmatprep.subr.bf16.mxu0 0
    %184 = vmatpush1.bf16.msra.mxu0 0
    %185 = vmatprep.subr.bf16.mxu0 0
    %186 = vmatpush1.bf16.msra.mxu0 0
    %187 = vmatprep.subr.bf16.mxu0 0
    %188 = vmatpush1.bf16.msra.mxu0 0
    %189 = vmatprep.subr.bf16.mxu0 0
    %190 = vmatpush1.bf16.msra.mxu0 0
    %191 = vmatprep.subr.bf16.mxu0 0
    %192 = vmatpush1.bf16.msra.mxu0 0
    %193 = vmatprep.subr.bf16.mxu0 0
    %194 = vmatpush1.bf16.msra.mxu0 0
    %195 = vmatprep.subr.bf16.mxu0 0
    %196 = vmatpush1.bf16.msra.mxu0 0
    %197 = vmatprep.subr.bf16.mxu0 0
    %198 = vmatpush1.bf16.msra.mxu0 0
    %199 = vmatprep.mubr.bf16.mxu0 0
    %200 = vmatmul.mubr.bf16.gmra.mrb[0].mxu0 %v95
    %v201 = vpop.f32.mrb[0].mxu0
    %v202 = vadd.f32 %v117, %v201
    %v203 = vpop.f32.mrb[0].mxu0
    %v204 = vpop.f32.mrb[0].mxu0
    %v205 = vadd.f32 %v117, %v204
    %v206 = vpop.f32.mrb[0].mxu0
    %207 = vdwg.mxu0
    %208 = vst.msk [vmem:[#allocation2] sm:$0xff] %vm48, %v202
    %209 = vst.msk [vmem:[#allocation2 + $0x8] sm:$0xff] %vm48, %v205
    // Predicated region
    $region22: #{tpu_custom_call.1} parent=1 // pred_check
      _
    $region23: #{tpu_custom_call.1} parent=1 // pred_check_branch
      %211 = sbr.rel (0) target = $region25
    $region24: #{tpu_custom_call.1} parent=1 // pred_region
      %s213 = ssub.s32 256, 256
      %214 = vsyncadd [#allocation3], %s213
      %s215 = sshll.u32 [#allocation2], 4
      %s216 = int_to_ptr.vmem [resolvable:$true] %s215
      %221 = dma.vmem_to_hbm [thread:$0]  %s216, 256, %s5, [#allocation3], 128, 128, 8
    $region25: #{tpu_custom_call.1} parent=1 // pred_fallthru
      _
    // Predicated region
    $region26: #{tpu_custom_call.1} parent=1 // pred_check
      _
    $region27: #{tpu_custom_call.1} parent=1 // pred_check_branch
      %223 = sbr.rel (0) target = $region29
    $region28: #{tpu_custom_call.1} parent=1 // pred_region
      %224 = dma.done [#allocation3], 256
    $region29: #{tpu_custom_call.1} parent=1 // pred_fallthru
      _
    %225 = vsyncpa [#allocation3], 1

</llo_original>
